<compile_context>
chip_gen: v7x
topology: tpu7x:2x2x1
jax: 0.10.0
libtpu: 0.0.40
codegen_flags: <defaults>
</compile_context>

<pallas_src>
import functools

import jax
import jax.numpy as jnp
from jax.experimental import pallas as pl
from jax.experimental.pallas import tpu as pltpu


def _conceptx_kernel(h_ref, c_ref, o_ref):
    """o[0, i] = sum_d c_scaled[0, d] * h[i, d] (concept pre-scaled by 1/||c||^2)."""
    o_ref[...] = jax.lax.dot_general(
        c_ref[...],                      # (1, D)       resident, pre-scaled
        h_ref[...],                      # (tile_n, D)  streamed rows
        dimension_numbers=(((1,), (1,)), ((), ())),
        preferred_element_type=jnp.float32,
    )                                    # (1, tile_n)  lane-dense f32 output


def _round_up(x, m):
    return pl.cdiv(x, m) * m


def _pick_tile_n(n, d, itemsize):
    """Largest row tile whose double-buffered input fits a v7x-safe VMEM budget."""
    per_buffer_budget = 16 * 1024 * 1024          # 2 buffers -> <= 32 MiB of hidden
    max_rows = max(per_buffer_budget // max(d * itemsize, 1), 128)
    tile = min(max_rows, 2048)                    # diminishing returns past ~2k rows
    tile = min(tile, _round_up(n, 128))           # don't tile past (rounded) N
    tile = max((tile // 128) * 128, 128)          # lane-dense output: multiple of 128
    return int(tile)


@functools.partial(jax.jit, static_argnames=("tile_n",))
def conceptx_activation(hidden_states, concept_scaled, *, tile_n=None):
    """hidden_states: (N, D); concept_scaled: (D,) already divided by ||concept||^2.

    Returns (N,) f32: hidden_states @ concept_scaled.
    """
    n, d = hidden_states.shape
    itemsize = jnp.dtype(hidden_states.dtype).itemsize
    if tile_n is None:
        tile_n = _pick_tile_n(n, d, itemsize)

    # Pad ONLY the (tiny) output so every output block is a full, unmasked
    # lane-dense store.  The big hidden-state input is left unpadded; Pallas
    # handles the partial trailing block and the garbage rows are sliced off.
    n_pad = int(_round_up(n, tile_n))
    grid_n = n_pad // tile_n
    c2 = concept_scaled.reshape(1, d).astype(hidden_states.dtype)

    # Double-buffered hidden tile + output tile + resident concept + headroom,
    # clamped well under v7x's 64 MiB physical VMEM.
    vmem_bytes = (2 * tile_n * d * itemsize       # hidden double buffer
                  + 2 * tile_n * 4                # (1, tile_n) f32 output double buffer
                  + 2 * d * itemsize              # concept
                  + (4 << 20))                    # headroom
    vmem_bytes = int(min(max(vmem_bytes, 32 << 20), 48 << 20))

    out = pl.pallas_call(
        _conceptx_kernel,
        out_shape=jax.ShapeDtypeStruct((1, n_pad), jnp.float32),
        grid_spec=pltpu.PrefetchScalarGridSpec(
            num_scalar_prefetch=0,
            grid=(grid_n,),
            in_specs=[
                pl.BlockSpec((tile_n, d), lambda i: (i, 0)),   # hidden rows (streamed)
                pl.BlockSpec((1, d), lambda i: (0, 0)),        # scaled concept (resident)
            ],
            out_specs=pl.BlockSpec((1, tile_n), lambda i: (0, i)),  # lane-dense output
        ),
        compiler_params=pltpu.CompilerParams(
            dimension_semantics=("parallel",),
            vmem_limit_bytes=vmem_bytes,
        ),
    )(hidden_states, c2)
    return out[0, :n]


class ConceptXOriJax:
    """Minimal JAX analogue of ConceptXOri holding a concepts matrix."""

    def __init__(self, cfg, concepts):
        self.cfg = cfg
        self.k = cfg["clustering_k"]
        self.concepts = concepts  # (k, d_model)

    @classmethod
    def code(cls):
        return "conceptx_ori"

    def activation_func(self, hidden_states, concept=None, concept_idx=None):
        # hidden_states: (batch, seq, d_model) -> (-1, d_model), matching the
        # PyTorch reshape; divisor is always (concept * concept).sum(), exactly
        # as in the reference (even when concept_idx is given).
        d = hidden_states.shape[-1]
        hs = hidden_states.reshape(-1, d)
        proj = concept if concept_idx is None else self.concepts[concept_idx, :]
        inv_denom = 1.0 / jnp.sum(jnp.asarray(concept, jnp.float32) ** 2)
        concept_scaled = jnp.asarray(proj, jnp.float32) * inv_denom
        return conceptx_activation(hs, concept_scaled)

    def get_concepts(self):
        return self.concepts


if __name__ == "__main__":
    key = jax.random.PRNGKey(0)
    k_h, k_c, k_cm = jax.random.split(key, 3)

    batch, seq, d_model, k_clusters = 2, 8, 32, 4
    cfg = {"clustering_k": k_clusters, "d_model": d_model, "site": "resid_post",
           "layer": 0, "act_name": "blocks.0.hook_resid_post"}

    hidden_states = jax.random.normal(k_h, (batch, seq, d_model), jnp.float32)
    concept = jax.random.normal(k_c, (d_model,), jnp.float32)
    concepts = jax.random.normal(k_cm, (k_clusters, d_model), jnp.float32)

    extractor = ConceptXOriJax(cfg, concepts)

    # Path 1: explicit concept vector.
    res = jax.block_until_ready(
        extractor.activation_func(hidden_states, concept=concept))

    # Path 2: concept selected by index (normalized by `concept`, as in ref).
    res_idx = jax.block_until_ready(
        extractor.activation_func(hidden_states, concept=concept, concept_idx=2))

    # Reference check in plain JAX.
    hs_flat = hidden_states.reshape(-1, d_model)
    ref1 = (hs_flat * concept).sum(-1) / (concept * concept).sum()
    ref2 = (hs_flat * concepts[2]).sum(-1) / (concept * concept).sum()
    assert res.shape == (batch * seq,)
    assert jnp.allclose(res, ref1, atol=1e-5, rtol=1e-5)
    assert jnp.allclose(res_idx, ref2, atol=1e-5, rtol=1e-5)

    # Native-dtype streaming path (no f32 upcast in HBM; f32 MXU accumulation).
    hs_bf16 = hidden_states.astype(jnp.bfloat16)
    res_bf16 = jax.block_until_ready(
        extractor.activation_func(hs_bf16, concept=concept))
    assert res_bf16.shape == (batch * seq,)
    assert jnp.allclose(res_bf16, ref1, atol=5e-2, rtol=0)

    # Non-tile-aligned row count (exercises the unpadded-input edge block).
    hs_odd = jax.random.normal(k_h, (3, 7, d_model), jnp.float32)
    res_odd = jax.block_until_ready(
        extractor.activation_func(hs_odd, concept=concept))
    ref_odd = (hs_odd.reshape(-1, d_model) * concept).sum(-1) / (concept * concept).sum()
    assert res_odd.shape == (3 * 7,)
    assert jnp.allclose(res_odd, ref_odd, atol=1e-5, rtol=1e-5)

    print("KERNEL_OK")
</pallas_src>

<mosaic_0001>
module attributes {stable_mosaic.version = 11 : i64} {
  func.func @_conceptx_kernel(%arg0: i32, %arg1: memref<128x32xf32, #tpu.memory_space<vmem>>, %arg2: memref<1x32xf32, #tpu.memory_space<vmem>>, %arg3: memref<1x128xf32, #tpu.memory_space<vmem>>) attributes {dimension_semantics = [#tpu.dimension_semantics<parallel>], iteration_bounds = array<i64: 1>, scalar_prefetch = 0 : i64, scratch_operands = 0 : i64, tpu.core_type = #tpu.core_type<tc>, window_params = [{transform_indices = @transform_0, window_bounds = array<i64: 128, 32>}, {pipeline_mode = #tpu.pipeline_mode<synchronous>, transform_indices = @transform_1, window_bounds = array<i64: 1, 32>}, {transform_indices = @transform_2, window_bounds = array<i64: 1, 128>}]} {
    %c0 = arith.constant 0 : index
    %c0_0 = arith.constant 0 : index
    %0 = vector.load %arg2[%c0, %c0_0] : memref<1x32xf32, #tpu.memory_space<vmem>>, vector<1x32xf32>
    %c0_1 = arith.constant 0 : index
    %c0_2 = arith.constant 0 : index
    %1 = vector.load %arg1[%c0_1, %c0_2] : memref<128x32xf32, #tpu.memory_space<vmem>>, vector<128x32xf32>
    %cst = arith.constant dense<0.000000e+00> : vector<1x128xf32>
    %2 = tpu.matmul %0, %1, %cst {dimension_numbers = #tpu.dot_dimension_numbers<[1], [1], [0], [0], [0, 0, 1, 0], [], []>} : vector<1x32xf32>, vector<128x32xf32>, vector<1x128xf32> -> vector<1x128xf32>
    %c0_3 = arith.constant 0 : index
    %c0_4 = arith.constant 0 : index
    %3 = vector.load %arg3[%c0_3, %c0_4] : memref<1x128xf32, #tpu.memory_space<vmem>>, vector<1x128xf32>
    tpu.vector_store %arg3[%c0_3, %c0_4], %2 {strides = array<i32>} : memref<1x128xf32, #tpu.memory_space<vmem>>, vector<1x128xf32>,
    return
  }
  func.func @transform_0(%arg0: i32) -> (i32, i32) {
    %c0_i32 = arith.constant 0 : i32
    %c0_i32_0 = arith.constant 0 : i32
    return %arg0, %c0_i32 : i32, i32
  }
  func.func @transform_1(%arg0: i32) -> (i32, i32) {
    %c0_i32 = arith.constant 0 : i32
    %c0_i32_0 = arith.constant 0 : i32
    %c0_i32_1 = arith.constant 0 : i32
    return %c0_i32, %c0_i32_0 : i32, i32
  }
  func.func @transform_2(%arg0: i32) -> (i32, i32) {
    %c0_i32 = arith.constant 0 : i32
    %c0_i32_0 = arith.constant 0 : i32
    return %c0_i32, %arg0 : i32, i32
  }
}

</mosaic_0001>

<llo_original>
// kernel: conceptx_activation.1
$region0: #{conceptx_activation.1}
  #allocation0 [shape = 'u32[]', space=smem, size = 0x4, offset = 0x4, fixed_abs, tag = 'smem constant byte address 0x4 - core index']
  #allocation1 [shape = 'u32[144,128]{1,0:T(1,128)}', space=vmem, size = 0x12000, scoped, tag = 'internal scratch']
  %s0 = inlined_call_operand.hbm [shape: f32[16,32], index: 0, kind: input, shape index: {}]
  %s1 = inlined_call_operand.vmem [shape: f32[1,32], index: 1, kind: input, shape index: {}]
  %s2 = inlined_call_operand.vmem [shape: f32[1,128], index: 2, kind: output, shape index: {}]
  %s3 = sld [smem:[#allocation0]]
  $region22: #{conceptx_activation.1} parent=0
    _
  %s5 = ssub.s32 1, %s3
  %s6 = scalar_select 0, %s5, %s3
  $region1: #{conceptx_activation.1} parent=0
    #allocation2 [shape = 'u8[65536]{0}', space=vmem, size = 0x10000, scoped, tag = 'input window, operand 0, single buffered']
    #allocation3 [shape = 's32[1]{0}', space=sflag, size = 0x4, scoped, tag = 'scoped memory for conceptx_activation.1']
    %7 = vsyncpa [#allocation3], 0
    // Predicated region
    $region2: #{conceptx_activation.1} parent=1 // pred_check
      _
    $region3: #{conceptx_activation.1} parent=1 // pred_check_branch
      %9 = sbr.rel (0) target = $region5
    $region4: #{conceptx_activation.1} parent=1 // pred_region
      %s11 = ssub.s32 2048, 256
      %12 = vsyncadd [#allocation3], %s11
      %s13 = sshll.u32 [#allocation2], 4
      %s14 = int_to_ptr.vmem [resolvable:$true] %s13
      %19 = dma.hbm_to_vmem [thread:$0]  %s0, 256, %s14, [#allocation3], 128, 128, 8
    $region5: #{conceptx_activation.1} parent=1 // pred_fallthru
      _
    // Predicated region
    $region6: #{conceptx_activation.1} parent=1 // pred_check
      _
    $region7: #{conceptx_activation.1} parent=1 // pred_check_branch
      %21 = sbr.rel (0) target = $region9
    $region8: #{conceptx_activation.1} parent=1 // pred_region
      _
    $region9: #{conceptx_activation.1} parent=1 // pred_fallthru
      _
    // Predicated region
    $region10: #{conceptx_activation.1} parent=1 // pred_check
      _
    $region11: #{conceptx_activation.1} parent=1 // pred_check_branch
      %23 = sbr.rel (0) target = $region13
    $region12: #{conceptx_activation.1} parent=1 // pred_region
      %24 = dma.done [#allocation3], 2048
    $region13: #{conceptx_activation.1} parent=1 // pred_fallthru
      _
    %v25 = vld [vmem:[%s1] sm:$0x1]
    %v26 = vld [vmem:[#allocation2] sm:$0xff]
    %v27 = vld [vmem:[#allocation2 + $0x8] sm:$0xff]
    %v28 = vld [vmem:[#allocation2 + $0x10] sm:$0xff]
    %v29 = vld [vmem:[#allocation2 + $0x18] sm:$0xff]
    %v30 = vld [vmem:[#allocation2 + $0x20] sm:$0xff]
    %v31 = vld [vmem:[#allocation2 + $0x28] sm:$0xff]
    %v32 = vld [vmem:[#allocation2 + $0x30] sm:$0xff]
    %v33 = vld [vmem:[#allocation2 + $0x38] sm:$0xff]
    %v34 = vld [vmem:[#allocation2 + $0x40] sm:$0xff]
    %v35 = vld [vmem:[#allocation2 + $0x48] sm:$0xff]
    %v36 = vld [vmem:[#allocation2 + $0x50] sm:$0xff]
    %v37 = vld [vmem:[#allocation2 + $0x58] sm:$0xff]
    %v38 = vld [vmem:[#allocation2 + $0x60] sm:$0xff]
    %v39 = vld [vmem:[#allocation2 + $0x68] sm:$0xff]
    %v40 = vld [vmem:[#allocation2 + $0x70] sm:$0xff]
    %v41 = vld [vmem:[#allocation2 + $0x78] sm:$0xff]
    %vm42 = vcmask 261120
    %v44 = vsel %vm42, %v25, 0
    %v47 = vsel %vm42, %v26, 0
    %v50 = vsel %vm42, %v27, 0
    %v53 = vsel %vm42, %v28, 0
    %v56 = vsel %vm42, %v29, 0
    %v59 = vsel %vm42, %v30, 0
    %v62 = vsel %vm42, %v31, 0
    %v65 = vsel %vm42, %v32, 0
    %v68 = vsel %vm42, %v33, 0
    %v71 = vsel %vm42, %v34, 0
    %v74 = vsel %vm42, %v35, 0
    %v77 = vsel %vm42, %v36, 0
    %v80 = vsel %vm42, %v37, 0
    %v83 = vsel %vm42, %v38, 0
    %v86 = vsel %vm42, %v39, 0
    %v89 = vsel %vm42, %v40, 0
    %v92 = vsel %vm42, %v41, 0
    %94 = vmatprep.subr.mxu0 0.0
    %95 = vmatpush1.xpose.msra.mxu0 %v47
    %96 = vmatprep.subr.mxu0 0.0
    %97 = vmatpush1.xpose.msra.mxu0 %v50
    %98 = vmatprep.subr.mxu0 0.0
    %99 = vmatpush1.xpose.msra.mxu0 %v53
    %100 = vmatprep.subr.mxu0 0.0
    %101 = vmatpush1.xpose.msra.mxu0 %v56
    %102 = vmatprep.subr.mxu0 0.0
    %103 = vmatpush1.xpose.msra.mxu0 %v59
    %104 = vmatprep.subr.mxu0 0.0
    %105 = vmatpush1.xpose.msra.mxu0 %v62
    %106 = vmatprep.subr.mxu0 0.0
    %107 = vmatpush1.xpose.msra.mxu0 %v65
    %108 = vmatprep.subr.mxu0 0.0
    %109 = vmatpush1.xpose.msra.mxu0 %v68
    %110 = vmatprep.subr.mxu0 0.0
    %111 = vmatpush1.xpose.msra.mxu0 %v71
    %112 = vmatprep.subr.mxu0 0.0
    %113 = vmatpush1.xpose.msra.mxu0 %v74
    %114 = vmatprep.subr.mxu0 0.0
    %115 = vmatpush1.xpose.msra.mxu0 %v77
    %116 = vmatprep.subr.mxu0 0.0
    %117 = vmatpush1.xpose.msra.mxu0 %v80
    %118 = vmatprep.subr.mxu0 0.0
    %119 = vmatpush1.xpose.msra.mxu0 %v83
    %120 = vmatprep.subr.mxu0 0.0
    %121 = vmatpush1.xpose.msra.mxu0 %v86
    %122 = vmatprep.subr.mxu0 0.0
    %123 = vmatpush1.xpose.msra.mxu0 %v89
    %124 = vmatprep.subr.mxu0 0.0
    %125 = vmatpush1.xpose.msra.mxu0 %v92
    %126 = vmatprep.subr.mxu0 0.0
    %127 = vmatpush1.xpose.msra.mxu0 0.0
    %128 = vmatprep.subr.mxu0 0.0
    %129 = vmatpush1.xpose.msra.mxu0 0.0
    %130 = vmatprep.subr.mxu0 0.0
    %131 = vmatpush1.xpose.msra.mxu0 0.0
    %132 = vmatprep.subr.mxu0 0.0
    %133 = vmatpush1.xpose.msra.mxu0 0.0
    %134 = vmatprep.subr.mxu0 0.0
    %135 = vmatpush1.xpose.msra.mxu0 0.0
    %136 = vmatprep.subr.mxu0 0.0
    %137 = vmatpush1.xpose.msra.mxu0 0.0
    %138 = vmatprep.subr.mxu0 0.0
    %139 = vmatpush1.xpose.msra.mxu0 0.0
    %140 = vmatprep.subr.mxu0 0.0
    %141 = vmatpush1.xpose.msra.mxu0 0.0
    %142 = vmatprep.subr.mxu0 0.0
    %143 = vmatpush1.xpose.msra.mxu0 0.0
    %144 = vmatprep.subr.mxu0 0.0
    %145 = vmatpush1.xpose.msra.mxu0 0.0
    %146 = vmatprep.subr.mxu0 0.0
    %147 = vmatpush1.xpose.msra.mxu0 0.0
    %148 = vmatprep.subr.mxu0 0.0
    %149 = vmatpush1.xpose.msra.mxu0 0.0
    %150 = vmatprep.subr.mxu0 0.0
    %151 = vmatpush1.xpose.msra.mxu0 0.0
    %152 = vmatprep.subr.mxu0 0.0
    %153 = vmatpush1.xpose.msra.mxu0 0.0
    %154 = vmatprep.subr.mxu0 0.0
    %155 = vmatpush1.xpose.msra.mxu0 0.0
    %156 = vmatprep.subr.mxu0 0.0
    %157 = vmatpush1.xpose.msra.mxu0 0.0
    %158 = vmatprep.mubr.f32.mxu0 0.0
    %159 = vmatmul.mubr.f32.gmra.mrb[0].mxu0 %v44
    %v160 = vpop.f32.mrb[0].mxu0
    %v161 = vadd.f32 0.0, %v160
    %v162 = vpop.f32.mrb[0].mxu0
    %163 = vdwg.mxu0
    %164 = vst [vmem:[%s2] sm:$0x1] %v161
    // Predicated region
    $region14: #{conceptx_activation.1} parent=1 // pred_check
      _
    $region15: #{conceptx_activation.1} parent=1 // pred_check_branch
      %166 = sbr.rel (0) target = $region17
    $region16: #{conceptx_activation.1} parent=1 // pred_region
      _
    $region17: #{conceptx_activation.1} parent=1 // pred_fallthru
      _
    // Predicated region
    $region18: #{conceptx_activation.1} parent=1 // pred_check
      _
    $region19: #{conceptx_activation.1} parent=1 // pred_check_branch
      %168 = sbr.rel (0) target = $region21
    $region20: #{conceptx_activation.1} parent=1 // pred_region
      _
    $region21: #{conceptx_activation.1} parent=1 // pred_fallthru
      _
    %169 = vsyncpa [#allocation3], 1

</llo_original>
